<compile_context>
chip_gen: v5e
topology: v5e:2x2
jax: 0.10.0
libtpu: 0.0.40
codegen_flags: <defaults>
</compile_context>

<pallas_src>
import functools

import jax
import jax.numpy as jnp
from jax.experimental import pallas as pl
from jax.experimental.pallas import tpu as pltpu

BN_EPS = 1e-5
GIN_EPS = 0.0  # PyG GINConv default eps (train_eps=False)

LANE = 128
SUBLANE = 8


# ---------------------------------------------------------------------------
# Fused Pallas kernel: 3x (GINConv -> BN -> ReLU) + mean-pool + output Linear
# ---------------------------------------------------------------------------
def _make_fused_kernel(num_layers, chunks, resident):
    n_layer_refs = 4 + 5 * (num_layers - 1)
    num_chunks = len(chunks)

    def kernel(*refs):
        a_hbm, xw0_ref, p_ref, invc_ref = refs[:4]
        lrefs = refs[4:4 + n_layer_refs]
        pw_ref, pb_ref, o_ref, a_buf, sems = refs[4 + n_layer_refs:]

        # Per-layer parameter ref groups (trace-time bookkeeping).
        layer_slices = []
        off = 0
        for i in range(num_layers):
            k = 4 if i == 0 else 5
            layer_slices.append(lrefs[off:off + k])
            off += k

        def resident_chunk_copy(ci):
            st, sz = chunks[ci]
            return pltpu.make_async_copy(
                a_hbm.at[pl.ds(st, sz), :],
                a_buf.at[pl.ds(st, sz), :],
                sems.at[ci])

        if resident:
            # Kick off ALL A-row-chunk DMAs immediately so the HBM transfer
            # overlaps the layer-1 compute below.
            for ci in range(num_chunks):
                resident_chunk_copy(ci).start()

        def aggregate(xw_bf16, layer_idx):
            """Computes A @ xw (f32 accumulation)."""
            if resident:
                if layer_idx == 0:
                    outs = []
                    for ci, (st, sz) in enumerate(chunks):
                        resident_chunk_copy(ci).wait()       # chunk ci landed
                        outs.append(jnp.dot(
                            a_buf[pl.ds(st, sz), :], xw_bf16,
                            preferred_element_type=jnp.float32))
                    return outs[0] if num_chunks == 1 else jnp.concatenate(outs, axis=0)
                # Layers 2..: A already resident in VMEM.
                return jnp.dot(a_buf[...], xw_bf16,
                               preferred_element_type=jnp.float32)

            # Fallback: stream A per layer with a 2-slot double buffer.
            def mk(ci, slot):
                st, sz = chunks[ci]
                return pltpu.make_async_copy(
                    a_hbm.at[pl.ds(st, sz), :],
                    a_buf.at[slot, pl.ds(0, sz), :],
                    sems.at[slot])

            outs = []
            mk(0, 0).start()
            for ci, (st, sz) in enumerate(chunks):
                slot = ci % 2
                if ci + 1 < num_chunks:
                    mk(ci + 1, 1 - slot).start()
                mk(ci, slot).wait()
                outs.append(jnp.dot(
                    a_buf[slot, pl.ds(0, sz), :], xw_bf16,
                    preferred_element_type=jnp.float32))
            return outs[0] if num_chunks == 1 else jnp.concatenate(outs, axis=0)

        h_bf16 = None
        xw = xw0_ref[...]                       # layer-1 x @ W1, precomputed (f32)
        for i in range(num_layers):             # unrolled at trace time
            if i == 0:
                b1, w2, gamma, beta = layer_slices[0]
            else:
                w1, b1, w2, gamma, beta = layer_slices[i]
                xw = jnp.dot(h_bf16, w1[...], preferred_element_type=jnp.float32)

            # GINConv, reassociated:
            #   Linear1((1+eps)*h + A@h) = (1+eps)*(h@W1) + A@(h@W1) + b1
            agg = aggregate(xw.astype(jnp.bfloat16), i)
            t = agg + (1.0 + GIN_EPS) * xw + b1[...]
            t = jnp.maximum(t, 0.0)                               # MLP ReLU
            # Second Linear; b2 omitted (exactly cancelled by BN mean subtract).
            t = jnp.dot(t.astype(jnp.bfloat16), w2[...],
                        preferred_element_type=jnp.float32)

            # BatchNorm1d, training-mode batch stats, single-pass.
            mean = jnp.mean(t, axis=0, keepdims=True)
            var = jnp.maximum(jnp.mean(t * t, axis=0, keepdims=True) - mean * mean, 0.0)
            y = (t - mean) * jax.lax.rsqrt(var + BN_EPS) * gamma[...] + beta[...]
            h = jnp.maximum(y, 0.0)                               # outer ReLU
            h_bf16 = h.astype(jnp.bfloat16)

        # global_mean_pool = (onehot @ h) * (1/count), then output Linear.
        g = jnp.dot(p_ref[...], h_bf16,
                    preferred_element_type=jnp.float32) * invc_ref[...]
        o_ref[...] = (jnp.dot(g.astype(jnp.bfloat16), pw_ref[...],
                              preferred_element_type=jnp.float32) + pb_ref[...])

    return kernel


# ---------------------------------------------------------------------------
# VMEM budget query (per-generation physical capacity, with headroom)
# ---------------------------------------------------------------------------
def _vmem_budget_bytes():
    cap = 64 * 1024 * 1024
    try:
        info = pltpu.get_tpu_info()
        cap = int(getattr(info, "vmem_capacity_bytes", cap))
    except Exception:
        pass
    return max(32 * 1024 * 1024, int(cap * 0.85))


def _fused_gin_call(a, xw0, p, invc, layer_inputs, pw, pb, num_layers):
    n = a.shape[0]
    hpad = xw0.shape[1]
    gpad = p.shape[0]

    inputs = [a, xw0, p, invc] + list(layer_inputs) + [pw, pb]

    budget = _vmem_budget_bytes()

    # Resident-A footprint: A(bf16) + small operands + output + ~6 (N,Hpad)
    # f32 temporaries + Mosaic headroom.
    a_bytes = 2 * n * n
    small_bytes = sum(int(v.size) * v.dtype.itemsize for v in inputs[1:])
    out_bytes = gpad * hpad * 4
    temps_bytes = 6 * n * hpad * 4
    headroom = 4 * 1024 * 1024
    resident = (a_bytes + small_bytes + out_bytes + temps_bytes + headroom) <= budget

    # Static row-chunk schedule for streaming A from HBM.
    chunk_rows = min(n, 512)
    chunks, st = [], 0
    while st < n:
        sz = min(chunk_rows, n - st)
        chunks.append((st, sz))
        st += sz

    if resident:
        scratch = [pltpu.VMEM((n, n), jnp.bfloat16),
                   pltpu.SemaphoreType.DMA((len(chunks),))]
    else:
        scratch = [pltpu.VMEM((2, chunk_rows, n), jnp.bfloat16),
                   pltpu.SemaphoreType.DMA((2,))]

    # Advisory cost estimate for XLA's scheduler.
    flops = 0
    for i in range(num_layers):
        flops += 2 * n * n * hpad                 # A @ xw (dominant)
        flops += 2 * n * hpad * hpad              # @ W2
        if i > 0:
            flops += 2 * n * hpad * hpad          # h @ W1
    flops += 2 * gpad * n * hpad + 2 * gpad * hpad * hpad
    a_passes = 1 if resident else num_layers
    cost = pl.CostEstimate(
        flops=flops,
        transcendentals=num_layers * hpad,        # rsqrt per channel
        bytes_accessed=a_passes * a_bytes + small_bytes + out_bytes)

    in_specs = ([pl.BlockSpec(memory_space=pl.ANY)] +                     # A in HBM
                [pl.BlockSpec(memory_space=pltpu.MemorySpace.VMEM)] * (len(inputs) - 1))

    return pl.pallas_call(
        _make_fused_kernel(num_layers, chunks, resident),
        out_shape=jax.ShapeDtypeStruct((gpad, hpad), jnp.float32),
        in_specs=in_specs,
        out_specs=pl.BlockSpec(memory_space=pltpu.MemorySpace.VMEM),
        scratch_shapes=scratch,
        compiler_params=pltpu.CompilerParams(vmem_limit_bytes=budget),
        cost_estimate=cost,
    )(*inputs)


# ---------------------------------------------------------------------------
# Padding helpers
# ---------------------------------------------------------------------------
def _round_up(v, m):
    return ((v + m - 1) // m) * m


def _pad_axis(arr, axis, target):
    pad = target - arr.shape[axis]
    if pad <= 0:
        return arr
    widths = [(0, 0)] * arr.ndim
    widths[axis] = (0, pad)
    return jnp.pad(arr, widths)


# ---------------------------------------------------------------------------
# Parameter init (deterministic, mirrors module __init__ shapes)
# ---------------------------------------------------------------------------
def init_params(key, input_dim=3, hidden_dim=64, num_layers=3):
    params = {"layers": []}
    for i in range(num_layers):
        cin = input_dim if i == 0 else hidden_dim
        key, k1, k2 = jax.random.split(key, 3)
        layer = {
            # Linear weights stored as (in, out) for y = x @ W + b
            "w1": (jax.random.normal(k1, (cin, hidden_dim), jnp.float32)
                   * (1.0 / jnp.sqrt(cin))),
            "b1": jnp.zeros((1, hidden_dim), jnp.float32),
            "w2": (jax.random.normal(k2, (hidden_dim, hidden_dim), jnp.float32)
                   * (1.0 / jnp.sqrt(hidden_dim))),
            # b2 kept for module parity; it is exactly cancelled by the
            # training-mode BatchNorm mean subtraction, so never fed to kernel.
            "b2": jnp.zeros((1, hidden_dim), jnp.float32),
            # BatchNorm1d defaults: weight=1, bias=0
            "gamma": jnp.ones((1, hidden_dim), jnp.float32),
            "beta": jnp.zeros((1, hidden_dim), jnp.float32),
        }
        params["layers"].append(layer)
    key, kp = jax.random.split(key)
    params["proj_w"] = (jax.random.normal(kp, (hidden_dim, hidden_dim), jnp.float32)
                        * (1.0 / jnp.sqrt(hidden_dim)))
    params["proj_b"] = jnp.zeros((1, hidden_dim), jnp.float32)
    return params


# ---------------------------------------------------------------------------
# Forward (plain-JAX glue: adjacency / pooling construction + padding/casts)
# ---------------------------------------------------------------------------
@functools.partial(jax.jit, static_argnames=("num_graphs",))
def gin_encoder_forward(params, x, edge_index, batch, num_graphs):
    n, _ = x.shape
    hidden = params["proj_w"].shape[0]
    num_layers = len(params["layers"])

    hpad = _round_up(hidden, LANE)
    gpad = _round_up(num_graphs, SUBLANE)

    # Dense adjacency A[dst, src] = #edges(src -> dst), built DIRECTLY in bf16
    # (small integer multiplicities are exact in bf16) -> no f32 N^2 HBM pass.
    ones = jnp.ones((edge_index.shape[1],), jnp.bfloat16)
    a = jnp.zeros((n, n), jnp.bfloat16).at[edge_index[1], edge_index[0]].add(ones)

    # Layer-1 xw = x @ W1 in the XLA wrapper ((N,3)@(3,64): too thin for MXU).
    w1_0 = _pad_axis(params["layers"][0]["w1"], 1, hpad)          # (cin, hpad) f32
    xw0 = jnp.dot(x.astype(jnp.float32), w1_0)                    # (n, hpad) f32

    # Mean-pool: exact one-hot (bf16) matmul, then multiply by 1/count in f32.
    onehot = (batch[None, :] == jnp.arange(num_graphs)[:, None])
    counts = jnp.maximum(onehot.sum(axis=1, keepdims=True).astype(jnp.float32), 1.0)
    p = _pad_axis(onehot.astype(jnp.bfloat16), 0, gpad)           # (gpad, n)
    invc = _pad_axis(1.0 / counts, 0, gpad)                       # (gpad, 1) f32

    layer_inputs = []
    for i, lyr in enumerate(params["layers"]):
        if i > 0:
            layer_inputs.append(
                _pad_axis(_pad_axis(lyr["w1"], 0, hpad), 1, hpad).astype(jnp.bfloat16))
        layer_inputs.append(_pad_axis(lyr["b1"], 1, hpad))
        layer_inputs.append(
            _pad_axis(_pad_axis(lyr["w2"], 0, hpad), 1, hpad).astype(jnp.bfloat16))
        layer_inputs.append(_pad_axis(lyr["gamma"], 1, hpad))
        layer_inputs.append(_pad_axis(lyr["beta"], 1, hpad))
    pw = _pad_axis(_pad_axis(params["proj_w"], 0, hpad), 1, hpad).astype(jnp.bfloat16)
    pb = _pad_axis(params["proj_b"], 1, hpad)

    out = _fused_gin_call(a, xw0, p, invc, layer_inputs, pw, pb, num_layers)
    return out[:num_graphs, :hidden]


# ---------------------------------------------------------------------------
if __name__ == "__main__":
    key = jax.random.PRNGKey(0)

    input_dim, hidden_dim, num_layers = 3, 64, 3
    n_nodes, n_edges, n_graphs = 16, 40, 2

    key, kx, ke = jax.random.split(key, 3)
    x = jax.random.normal(kx, (n_nodes, input_dim), jnp.float32)
    edge_index = jax.random.randint(ke, (2, n_edges), 0, n_nodes, jnp.int32)
    batch = jnp.concatenate([
        jnp.zeros((n_nodes // 2,), jnp.int32),
        jnp.ones((n_nodes - n_nodes // 2,), jnp.int32),
    ])

    params = init_params(jax.random.PRNGKey(0), input_dim, hidden_dim, num_layers)

    out = gin_encoder_forward(params, x, edge_index, batch, num_graphs=n_graphs)
    out = jax.block_until_ready(out)

    assert out.shape == (n_graphs, hidden_dim)
    assert bool(jnp.all(jnp.isfinite(out)))
    print("KERNEL_OK")
</pallas_src>

<mosaic_0001>
module attributes {stable_mosaic.version = 11 : i64} {
  func.func @kernel(%arg0: memref<16x16xbf16, #tpu.memory_space<any>>, %arg1: memref<16x128xf32, #tpu.memory_space<vmem>>, %arg2: memref<8x16xbf16, #tpu.memory_space<vmem>>, %arg3: memref<8x1xf32, #tpu.memory_space<vmem>>, %arg4: memref<1x128xf32, #tpu.memory_space<vmem>>, %arg5: memref<128x128xbf16, #tpu.memory_space<vmem>>, %arg6: memref<1x128xf32, #tpu.memory_space<vmem>>, %arg7: memref<1x128xf32, #tpu.memory_space<vmem>>, %arg8: memref<128x128xbf16, #tpu.memory_space<vmem>>, %arg9: memref<1x128xf32, #tpu.memory_space<vmem>>, %arg10: memref<128x128xbf16, #tpu.memory_space<vmem>>, %arg11: memref<1x128xf32, #tpu.memory_space<vmem>>, %arg12: memref<1x128xf32, #tpu.memory_space<vmem>>, %arg13: memref<128x128xbf16, #tpu.memory_space<vmem>>, %arg14: memref<1x128xf32, #tpu.memory_space<vmem>>, %arg15: memref<128x128xbf16, #tpu.memory_space<vmem>>, %arg16: memref<1x128xf32, #tpu.memory_space<vmem>>, %arg17: memref<1x128xf32, #tpu.memory_space<vmem>>, %arg18: memref<128x128xbf16, #tpu.memory_space<vmem>>, %arg19: memref<1x128xf32, #tpu.memory_space<vmem>>, %arg20: memref<8x128xf32, #tpu.memory_space<vmem>>, %arg21: memref<16x16xbf16, #tpu.memory_space<vmem>>, %arg22: memref<1x!tpu.dma_semaphore, #tpu.memory_space<semaphore_mem>>) attributes {dimension_semantics = [], scalar_prefetch = 0 : i64, scratch_operands = 2 : i64, tpu.core_type = #tpu.core_type<tc>} {
    %c0_i32 = arith.constant 0 : i32
    %c0_i32_0 = arith.constant 0 : i32
    %c0_i32_1 = arith.constant 0 : i32
    %0 = tpu.memref_slice %arg0[%c0_i32_0, %c0_i32_1] : memref<16x16xbf16, #tpu.memory_space<any>> -> memref<16x16xbf16, #tpu.memory_space<any>>
    %c0_i32_2 = arith.constant 0 : i32
    %c0_i32_3 = arith.constant 0 : i32
    %1 = tpu.memref_slice %arg21[%c0_i32_2, %c0_i32_3] : memref<16x16xbf16, #tpu.memory_space<vmem>> -> memref<16x16xbf16, #tpu.memory_space<vmem>>
    %2 = tpu.memref_slice %arg22[%c0_i32] : memref<1x!tpu.dma_semaphore, #tpu.memory_space<semaphore_mem>> -> memref<1x!tpu.dma_semaphore, #tpu.memory_space<semaphore_mem>>
    %3 = tpu.memref_squeeze %2 : memref<1x!tpu.dma_semaphore, #tpu.memory_space<semaphore_mem>> -> memref<!tpu.dma_semaphore, #tpu.memory_space<semaphore_mem>>
    tpu.enqueue_dma source(%0 : memref<16x16xbf16, #tpu.memory_space<any>>) target(%1 : memref<16x16xbf16, #tpu.memory_space<vmem>>) target_semaphore(%3 : memref<!tpu.dma_semaphore, #tpu.memory_space<semaphore_mem>>)
    %c0 = arith.constant 0 : index
    %c0_4 = arith.constant 0 : index
    %4 = vector.load %arg1[%c0, %c0_4] : memref<16x128xf32, #tpu.memory_space<vmem>>, vector<16x128xf32>
    %5 = arith.truncf %4 : vector<16x128xf32> to vector<16x128xbf16>
    %c0_i32_5 = arith.constant 0 : i32
    %c0_i32_6 = arith.constant 0 : i32
    %c0_i32_7 = arith.constant 0 : i32
    %6 = tpu.memref_slice %arg0[%c0_i32_6, %c0_i32_7] : memref<16x16xbf16, #tpu.memory_space<any>> -> memref<16x16xbf16, #tpu.memory_space<any>>
    %c0_i32_8 = arith.constant 0 : i32
    %c0_i32_9 = arith.constant 0 : i32
    %7 = tpu.memref_slice %arg21[%c0_i32_8, %c0_i32_9] : memref<16x16xbf16, #tpu.memory_space<vmem>> -> memref<16x16xbf16, #tpu.memory_space<vmem>>
    %8 = tpu.memref_slice %arg22[%c0_i32_5] : memref<1x!tpu.dma_semaphore, #tpu.memory_space<semaphore_mem>> -> memref<1x!tpu.dma_semaphore, #tpu.memory_space<semaphore_mem>>
    %9 = tpu.memref_squeeze %8 : memref<1x!tpu.dma_semaphore, #tpu.memory_space<semaphore_mem>> -> memref<!tpu.dma_semaphore, #tpu.memory_space<semaphore_mem>>
    tpu.wait_dma2 semaphore(%9 : memref<!tpu.dma_semaphore, #tpu.memory_space<semaphore_mem>>) src(%6 : memref<16x16xbf16, #tpu.memory_space<any>>) dst(%7 : memref<16x16xbf16, #tpu.memory_space<vmem>>)
    %c0_10 = arith.constant 0 : index
    %c0_11 = arith.constant 0 : index
    %10 = vector.load %arg21[%c0_10, %c0_11] : memref<16x16xbf16, #tpu.memory_space<vmem>>, vector<16x16xbf16>
    %cst = arith.constant dense<0.000000e+00> : vector<16x128xf32>
    %11 = tpu.matmul %10, %5, %cst {dimension_numbers = #tpu.dot_dimension_numbers<[1], [0], [0], [1], [0, 0, 1, 1], [], []>} : vector<16x16xbf16>, vector<16x128xbf16>, vector<16x128xf32> -> vector<16x128xf32>
    %cst_12 = arith.constant 1.000000e+00 : f32
    %12 = vector.broadcast %cst_12 : f32 to vector<16x128xf32>
    %13 = arith.mulf %12, %4 : vector<16x128xf32>
    %14 = arith.addf %11, %13 : vector<16x128xf32>
    %c0_13 = arith.constant 0 : index
    %c0_14 = arith.constant 0 : index
    %15 = vector.load %arg4[%c0_13, %c0_14] : memref<1x128xf32, #tpu.memory_space<vmem>>, vector<1x128xf32>
    %16 = vector.broadcast %15 : vector<1x128xf32> to vector<16x128xf32>
    %17 = arith.addf %14, %16 : vector<16x128xf32>
    %cst_15 = arith.constant 0.000000e+00 : f32
    %18 = vector.broadcast %cst_15 : f32 to vector<16x128xf32>
    %19 = arith.maximumf %17, %18 : vector<16x128xf32>
    %20 = arith.truncf %19 : vector<16x128xf32> to vector<16x128xbf16>
    %c0_16 = arith.constant 0 : index
    %c0_17 = arith.constant 0 : index
    %21 = vector.load %arg5[%c0_16, %c0_17] : memref<128x128xbf16, #tpu.memory_space<vmem>>, vector<128x128xbf16>
    %cst_18 = arith.constant dense<0.000000e+00> : vector<16x128xf32>
    %22 = tpu.matmul %20, %21, %cst_18 {dimension_numbers = #tpu.dot_dimension_numbers<[1], [0], [0], [1], [0, 0, 1, 1], [], []>} : vector<16x128xbf16>, vector<128x128xbf16>, vector<16x128xf32> -> vector<16x128xf32>
    %cst_19 = arith.constant dense<0.000000e+00> : vector<128xf32>
    %23 = vector.multi_reduction <add>, %22, %cst_19 [0] : vector<16x128xf32> to vector<128xf32>
    %24 = vector.shape_cast %23 : vector<128xf32> to vector<1x128xf32>
    %cst_20 = arith.constant 1.600000e+01 : f32
    %25 = vector.broadcast %cst_20 : f32 to vector<1x128xf32>
    %26 = arith.divf %24, %25 : vector<1x128xf32>
    %27 = arith.mulf %22, %22 : vector<16x128xf32>
    %cst_21 = arith.constant dense<0.000000e+00> : vector<128xf32>
    %28 = vector.multi_reduction <add>, %27, %cst_21 [0] : vector<16x128xf32> to vector<128xf32>
    %29 = vector.shape_cast %28 : vector<128xf32> to vector<1x128xf32>
    %cst_22 = arith.constant 1.600000e+01 : f32
    %30 = vector.broadcast %cst_22 : f32 to vector<1x128xf32>
    %31 = arith.divf %29, %30 : vector<1x128xf32>
    %32 = arith.mulf %26, %26 : vector<1x128xf32>
    %33 = arith.subf %31, %32 : vector<1x128xf32>
    %cst_23 = arith.constant 0.000000e+00 : f32
    %34 = vector.broadcast %cst_23 : f32 to vector<1x128xf32>
    %35 = arith.maximumf %33, %34 : vector<1x128xf32>
    %36 = vector.broadcast %26 : vector<1x128xf32> to vector<16x128xf32>
    %37 = arith.subf %22, %36 : vector<16x128xf32>
    %cst_24 = arith.constant 9.99999974E-6 : f32
    %38 = vector.broadcast %cst_24 : f32 to vector<1x128xf32>
    %39 = arith.addf %35, %38 : vector<1x128xf32>
    %40 = math.rsqrt %39 : vector<1x128xf32>
    %41 = vector.broadcast %40 : vector<1x128xf32> to vector<16x128xf32>
    %42 = arith.mulf %37, %41 : vector<16x128xf32>
    %c0_25 = arith.constant 0 : index
    %c0_26 = arith.constant 0 : index
    %43 = vector.load %arg6[%c0_25, %c0_26] : memref<1x128xf32, #tpu.memory_space<vmem>>, vector<1x128xf32>
    %44 = vector.broadcast %43 : vector<1x128xf32> to vector<16x128xf32>
    %45 = arith.mulf %42, %44 : vector<16x128xf32>
    %c0_27 = arith.constant 0 : index
    %c0_28 = arith.constant 0 : index
    %46 = vector.load %arg7[%c0_27, %c0_28] : memref<1x128xf32, #tpu.memory_space<vmem>>, vector<1x128xf32>
    %47 = vector.broadcast %46 : vector<1x128xf32> to vector<16x128xf32>
    %48 = arith.addf %45, %47 : vector<16x128xf32>
    %cst_29 = arith.constant 0.000000e+00 : f32
    %49 = vector.broadcast %cst_29 : f32 to vector<16x128xf32>
    %50 = arith.maximumf %48, %49 : vector<16x128xf32>
    %51 = arith.truncf %50 : vector<16x128xf32> to vector<16x128xbf16>
    %c0_30 = arith.constant 0 : index
    %c0_31 = arith.constant 0 : index
    %52 = vector.load %arg8[%c0_30, %c0_31] : memref<128x128xbf16, #tpu.memory_space<vmem>>, vector<128x128xbf16>
    %cst_32 = arith.constant dense<0.000000e+00> : vector<16x128xf32>
    %53 = tpu.matmul %51, %52, %cst_32 {dimension_numbers = #tpu.dot_dimension_numbers<[1], [0], [0], [1], [0, 0, 1, 1], [], []>} : vector<16x128xbf16>, vector<128x128xbf16>, vector<16x128xf32> -> vector<16x128xf32>
    %54 = arith.truncf %53 : vector<16x128xf32> to vector<16x128xbf16>
    %c0_33 = arith.constant 0 : index
    %c0_34 = arith.constant 0 : index
    %55 = vector.load %arg21[%c0_33, %c0_34] : memref<16x16xbf16, #tpu.memory_space<vmem>>, vector<16x16xbf16>
    %cst_35 = arith.constant dense<0.000000e+00> : vector<16x128xf32>
    %56 = tpu.matmul %55, %54, %cst_35 {dimension_numbers = #tpu.dot_dimension_numbers<[1], [0], [0], [1], [0, 0, 1, 1], [], []>} : vector<16x16xbf16>, vector<16x128xbf16>, vector<16x128xf32> -> vector<16x128xf32>
    %cst_36 = arith.constant 1.000000e+00 : f32
    %57 = vector.broadcast %cst_36 : f32 to vector<16x128xf32>
    %58 = arith.mulf %57, %53 : vector<16x128xf32>
    %59 = arith.addf %56, %58 : vector<16x128xf32>
    %c0_37 = arith.constant 0 : index
    %c0_38 = arith.constant 0 : index
    %60 = vector.load %arg9[%c0_37, %c0_38] : memref<1x128xf32, #tpu.memory_space<vmem>>, vector<1x128xf32>
    %61 = vector.broadcast %60 : vector<1x128xf32> to vector<16x128xf32>
    %62 = arith.addf %59, %61 : vector<16x128xf32>
    %cst_39 = arith.constant 0.000000e+00 : f32
    %63 = vector.broadcast %cst_39 : f32 to vector<16x128xf32>
    %64 = arith.maximumf %62, %63 : vector<16x128xf32>
    %65 = arith.truncf %64 : vector<16x128xf32> to vector<16x128xbf16>
    %c0_40 = arith.constant 0 : index
    %c0_41 = arith.constant 0 : index
    %66 = vector.load %arg10[%c0_40, %c0_41] : memref<128x128xbf16, #tpu.memory_space<vmem>>, vector<128x128xbf16>
    %cst_42 = arith.constant dense<0.000000e+00> : vector<16x128xf32>
    %67 = tpu.matmul %65, %66, %cst_42 {dimension_numbers = #tpu.dot_dimension_numbers<[1], [0], [0], [1], [0, 0, 1, 1], [], []>} : vector<16x128xbf16>, vector<128x128xbf16>, vector<16x128xf32> -> vector<16x128xf32>
    %cst_43 = arith.constant dense<0.000000e+00> : vector<128xf32>
    %68 = vector.multi_reduction <add>, %67, %cst_43 [0] : vector<16x128xf32> to vector<128xf32>
    %69 = vector.shape_cast %68 : vector<128xf32> to vector<1x128xf32>
    %cst_44 = arith.constant 1.600000e+01 : f32
    %70 = vector.broadcast %cst_44 : f32 to vector<1x128xf32>
    %71 = arith.divf %69, %70 : vector<1x128xf32>
    %72 = arith.mulf %67, %67 : vector<16x128xf32>
    %cst_45 = arith.constant dense<0.000000e+00> : vector<128xf32>
    %73 = vector.multi_reduction <add>, %72, %cst_45 [0] : vector<16x128xf32> to vector<128xf32>
    %74 = vector.shape_cast %73 : vector<128xf32> to vector<1x128xf32>
    %cst_46 = arith.constant 1.600000e+01 : f32
    %75 = vector.broadcast %cst_46 : f32 to vector<1x128xf32>
    %76 = arith.divf %74, %75 : vector<1x128xf32>
    %77 = arith.mulf %71, %71 : vector<1x128xf32>
    %78 = arith.subf %76, %77 : vector<1x128xf32>
    %cst_47 = arith.constant 0.000000e+00 : f32
    %79 = vector.broadcast %cst_47 : f32 to vector<1x128xf32>
    %80 = arith.maximumf %78, %79 : vector<1x128xf32>
    %81 = vector.broadcast %71 : vector<1x128xf32> to vector<16x128xf32>
    %82 = arith.subf %67, %81 : vector<16x128xf32>
    %cst_48 = arith.constant 9.99999974E-6 : f32
    %83 = vector.broadcast %cst_48 : f32 to vector<1x128xf32>
    %84 = arith.addf %80, %83 : vector<1x128xf32>
    %85 = math.rsqrt %84 : vector<1x128xf32>
    %86 = vector.broadcast %85 : vector<1x128xf32> to vector<16x128xf32>
    %87 = arith.mulf %82, %86 : vector<16x128xf32>
    %c0_49 = arith.constant 0 : index
    %c0_50 = arith.constant 0 : index
    %88 = vector.load %arg11[%c0_49, %c0_50] : memref<1x128xf32, #tpu.memory_space<vmem>>, vector<1x128xf32>
    %89 = vector.broadcast %88 : vector<1x128xf32> to vector<16x128xf32>
    %90 = arith.mulf %87, %89 : vector<16x128xf32>
    %c0_51 = arith.constant 0 : index
    %c0_52 = arith.constant 0 : index
    %91 = vector.load %arg12[%c0_51, %c0_52] : memref<1x128xf32, #tpu.memory_space<vmem>>, vector<1x128xf32>
    %92 = vector.broadcast %91 : vector<1x128xf32> to vector<16x128xf32>
    %93 = arith.addf %90, %92 : vector<16x128xf32>
    %cst_53 = arith.constant 0.000000e+00 : f32
    %94 = vector.broadcast %cst_53 : f32 to vector<16x128xf32>
    %95 = arith.maximumf %93, %94 : vector<16x128xf32>
    %96 = arith.truncf %95 : vector<16x128xf32> to vector<16x128xbf16>
    %c0_54 = arith.constant 0 : index
    %c0_55 = arith.constant 0 : index
    %97 = vector.load %arg13[%c0_54, %c0_55] : memref<128x128xbf16, #tpu.memory_space<vmem>>, vector<128x128xbf16>
    %cst_56 = arith.constant dense<0.000000e+00> : vector<16x128xf32>
    %98 = tpu.matmul %96, %97, %cst_56 {dimension_numbers = #tpu.dot_dimension_numbers<[1], [0], [0], [1], [0, 0, 1, 1], [], []>} : vector<16x128xbf16>, vector<128x128xbf16>, vector<16x128xf32> -> vector<16x128xf32>
    %99 = arith.truncf %98 : vector<16x128xf32> to vector<16x128xbf16>
    %c0_57 = arith.constant 0 : index
    %c0_58 = arith.constant 0 : index
    %100 = vector.load %arg21[%c0_57, %c0_58] : memref<16x16xbf16, #tpu.memory_space<vmem>>, vector<16x16xbf16>
    %cst_59 = arith.constant dense<0.000000e+00> : vector<16x128xf32>
    %101 = tpu.matmul %100, %99, %cst_59 {dimension_numbers = #tpu.dot_dimension_numbers<[1], [0], [0], [1], [0, 0, 1, 1], [], []>} : vector<16x16xbf16>, vector<16x128xbf16>, vector<16x128xf32> -> vector<16x128xf32>
    %cst_60 = arith.constant 1.000000e+00 : f32
    %102 = vector.broadcast %cst_60 : f32 to vector<16x128xf32>
    %103 = arith.mulf %102, %98 : vector<16x128xf32>
    %104 = arith.addf %101, %103 : vector<16x128xf32>
    %c0_61 = arith.constant 0 : index
    %c0_62 = arith.constant 0 : index
    %105 = vector.load %arg14[%c0_61, %c0_62] : memref<1x128xf32, #tpu.memory_space<vmem>>, vector<1x128xf32>
    %106 = vector.broadcast %105 : vector<1x128xf32> to vector<16x128xf32>
    %107 = arith.addf %104, %106 : vector<16x128xf32>
    %cst_63 = arith.constant 0.000000e+00 : f32
    %108 = vector.broadcast %cst_63 : f32 to vector<16x128xf32>
    %109 = arith.maximumf %107, %108 : vector<16x128xf32>
    %110 = arith.truncf %109 : vector<16x128xf32> to vector<16x128xbf16>
    %c0_64 = arith.constant 0 : index
    %c0_65 = arith.constant 0 : index
    %111 = vector.load %arg15[%c0_64, %c0_65] : memref<128x128xbf16, #tpu.memory_space<vmem>>, vector<128x128xbf16>
    %cst_66 = arith.constant dense<0.000000e+00> : vector<16x128xf32>
    %112 = tpu.matmul %110, %111, %cst_66 {dimension_numbers = #tpu.dot_dimension_numbers<[1], [0], [0], [1], [0, 0, 1, 1], [], []>} : vector<16x128xbf16>, vector<128x128xbf16>, vector<16x128xf32> -> vector<16x128xf32>
    %cst_67 = arith.constant dense<0.000000e+00> : vector<128xf32>
    %113 = vector.multi_reduction <add>, %112, %cst_67 [0] : vector<16x128xf32> to vector<128xf32>
    %114 = vector.shape_cast %113 : vector<128xf32> to vector<1x128xf32>
    %cst_68 = arith.constant 1.600000e+01 : f32
    %115 = vector.broadcast %cst_68 : f32 to vector<1x128xf32>
    %116 = arith.divf %114, %115 : vector<1x128xf32>
    %117 = arith.mulf %112, %112 : vector<16x128xf32>
    %cst_69 = arith.constant dense<0.000000e+00> : vector<128xf32>
    %118 = vector.multi_reduction <add>, %117, %cst_69 [0] : vector<16x128xf32> to vector<128xf32>
    %119 = vector.shape_cast %118 : vector<128xf32> to vector<1x128xf32>
    %cst_70 = arith.constant 1.600000e+01 : f32
    %120 = vector.broadcast %cst_70 : f32 to vector<1x128xf32>
    %121 = arith.divf %119, %120 : vector<1x128xf32>
    %122 = arith.mulf %116, %116 : vector<1x128xf32>
    %123 = arith.subf %121, %122 : vector<1x128xf32>
    %cst_71 = arith.constant 0.000000e+00 : f32
    %124 = vector.broadcast %cst_71 : f32 to vector<1x128xf32>
    %125 = arith.maximumf %123, %124 : vector<1x128xf32>
    %126 = vector.broadcast %116 : vector<1x128xf32> to vector<16x128xf32>
    %127 = arith.subf %112, %126 : vector<16x128xf32>
    %cst_72 = arith.constant 9.99999974E-6 : f32
    %128 = vector.broadcast %cst_72 : f32 to vector<1x128xf32>
    %129 = arith.addf %125, %128 : vector<1x128xf32>
    %130 = math.rsqrt %129 : vector<1x128xf32>
    %131 = vector.broadcast %130 : vector<1x128xf32> to vector<16x128xf32>
    %132 = arith.mulf %127, %131 : vector<16x128xf32>
    %c0_73 = arith.constant 0 : index
    %c0_74 = arith.constant 0 : index
    %133 = vector.load %arg16[%c0_73, %c0_74] : memref<1x128xf32, #tpu.memory_space<vmem>>, vector<1x128xf32>
    %134 = vector.broadcast %133 : vector<1x128xf32> to vector<16x128xf32>
    %135 = arith.mulf %132, %134 : vector<16x128xf32>
    %c0_75 = arith.constant 0 : index
    %c0_76 = arith.constant 0 : index
    %136 = vector.load %arg17[%c0_75, %c0_76] : memref<1x128xf32, #tpu.memory_space<vmem>>, vector<1x128xf32>
    %137 = vector.broadcast %136 : vector<1x128xf32> to vector<16x128xf32>
    %138 = arith.addf %135, %137 : vector<16x128xf32>
    %cst_77 = arith.constant 0.000000e+00 : f32
    %139 = vector.broadcast %cst_77 : f32 to vector<16x128xf32>
    %140 = arith.maximumf %138, %139 : vector<16x128xf32>
    %141 = arith.truncf %140 : vector<16x128xf32> to vector<16x128xbf16>
    %c0_78 = arith.constant 0 : index
    %c0_79 = arith.constant 0 : index
    %142 = vector.load %arg2[%c0_78, %c0_79] : memref<8x16xbf16, #tpu.memory_space<vmem>>, vector<8x16xbf16>
    %cst_80 = arith.constant dense<0.000000e+00> : vector<8x128xf32>
    %143 = tpu.matmul %142, %141, %cst_80 {dimension_numbers = #tpu.dot_dimension_numbers<[1], [0], [0], [1], [0, 0, 1, 1], [], []>} : vector<8x16xbf16>, vector<16x128xbf16>, vector<8x128xf32> -> vector<8x128xf32>
    %c0_81 = arith.constant 0 : index
    %c0_82 = arith.constant 0 : index
    %144 = vector.load %arg3[%c0_81, %c0_82] : memref<8x1xf32, #tpu.memory_space<vmem>>, vector<8x1xf32>
    %145 = vector.broadcast %144 : vector<8x1xf32> to vector<8x128xf32>
    %146 = arith.mulf %143, %145 : vector<8x128xf32>
    %147 = arith.truncf %146 : vector<8x128xf32> to vector<8x128xbf16>
    %c0_83 = arith.constant 0 : index
    %c0_84 = arith.constant 0 : index
    %148 = vector.load %arg18[%c0_83, %c0_84] : memref<128x128xbf16, #tpu.memory_space<vmem>>, vector<128x128xbf16>
    %cst_85 = arith.constant dense<0.000000e+00> : vector<8x128xf32>
    %149 = tpu.matmul %147, %148, %cst_85 {dimension_numbers = #tpu.dot_dimension_numbers<[1], [0], [0], [1], [0, 0, 1, 1], [], []>} : vector<8x128xbf16>, vector<128x128xbf16>, vector<8x128xf32> -> vector<8x128xf32>
    %c0_86 = arith.constant 0 : index
    %c0_87 = arith.constant 0 : index
    %150 = vector.load %arg19[%c0_86, %c0_87] : memref<1x128xf32, #tpu.memory_space<vmem>>, vector<1x128xf32>
    %151 = vector.broadcast %150 : vector<1x128xf32> to vector<8x128xf32>
    %152 = arith.addf %149, %151 : vector<8x128xf32>
    %c0_88 = arith.constant 0 : index
    %c0_89 = arith.constant 0 : index
    %153 = vector.load %arg20[%c0_88, %c0_89] : memref<8x128xf32, #tpu.memory_space<vmem>>, vector<8x128xf32>
    tpu.vector_store %arg20[%c0_88, %c0_89], %152 {strides = array<i32>} : memref<8x128xf32, #tpu.memory_space<vmem>>, vector<8x128xf32>,
    return
  }
}

</mosaic_0001>

<llo_original>
// kernel: gin_encoder_forward.1
$region0: #{gin_encoder_forward.1}
  #allocation0 [shape = 'u32[]', space=smem, size = 0x4, offset = 0x4, fixed_abs, tag = 'smem constant byte address 0x4 - core index']
  #allocation1 [shape = 'u32[72,128]{1,0:T(1,128)}', space=vmem, size = 0x9000, scoped, tag = 'internal scratch']
  #allocation2 [shape = 'bf16[16,16]{1,0:T(8,128)(2,1)}', space=vmem, size = 0x1000, scoped, tag = 'scratch operand']
  #allocation3 [shape = 's32[1]{0}', space=sflag, size = 0x4, scoped, tag = 'scratch operand']
  #allocation4 [shape = 's32[]', space=sflag, size = 0x4, offset = 0, fixed_abs, tag = 'sflag constant byte address 0x0 - dummy sync flag']
  %s0 = inlined_call_operand.vmem [shape: bf16[16,16], index: 0, kind: input, shape index: {}]
  %s1 = inlined_call_operand.vmem [shape: f32[16,128], index: 1, kind: input, shape index: {}]
  %s2 = inlined_call_operand.vmem [shape: bf16[8,16], index: 2, kind: input, shape index: {}]
  %s3 = inlined_call_operand.vmem [shape: f32[8,1], index: 3, kind: input, shape index: {}]
  %s4 = inlined_call_operand.vmem [shape: f32[1,128], index: 4, kind: input, shape index: {}]
  %s5 = inlined_call_operand.vmem [shape: bf16[128,128], index: 5, kind: input, shape index: {}]
  %s6 = inlined_call_operand.vmem [shape: f32[1,128], index: 6, kind: input, shape index: {}]
  %s7 = inlined_call_operand.vmem [shape: f32[1,128], index: 7, kind: input, shape index: {}]
  %s8 = inlined_call_operand.vmem [shape: bf16[128,128], index: 8, kind: input, shape index: {}]
  %s9 = inlined_call_operand.vmem [shape: f32[1,128], index: 9, kind: input, shape index: {}]
  %s10 = inlined_call_operand.vmem [shape: bf16[128,128], index: 10, kind: input, shape index: {}]
  %s11 = inlined_call_operand.vmem [shape: f32[1,128], index: 11, kind: input, shape index: {}]
  %s12 = inlined_call_operand.vmem [shape: f32[1,128], index: 12, kind: input, shape index: {}]
  %s13 = inlined_call_operand.vmem [shape: bf16[128,128], index: 13, kind: input, shape index: {}]
  %s14 = inlined_call_operand.vmem [shape: f32[1,128], index: 14, kind: input, shape index: {}]
  %s15 = inlined_call_operand.vmem [shape: bf16[128,128], index: 15, kind: input, shape index: {}]
  %s16 = inlined_call_operand.vmem [shape: f32[1,128], index: 16, kind: input, shape index: {}]
  %s17 = inlined_call_operand.vmem [shape: f32[1,128], index: 17, kind: input, shape index: {}]
  %s18 = inlined_call_operand.vmem [shape: bf16[128,128], index: 18, kind: input, shape index: {}]
  %s19 = inlined_call_operand.vmem [shape: f32[1,128], index: 19, kind: input, shape index: {}]
  %s20 = inlined_call_operand.vmem [shape: f32[8,128], index: 20, kind: output, shape index: {}]
  %s21 = sld [smem:[#allocation0]]
  $region120: #{gin_encoder_forward.1} parent=0
    _
  %s23 = ssub.s32 1, %s21
  %s24 = scalar_select 0, %s23, %s21
  // Predicated region
  $region2: #{gin_encoder_forward.1} parent=0 // pred_check
    _
  $region3: #{gin_encoder_forward.1} parent=0 // pred_check_branch
    %26 = sbr.rel (0) target = $region5
  $region4: #{gin_encoder_forward.1} parent=0 // pred_region
    _
  $region5: #{gin_encoder_forward.1} parent=0 // pred_fallthru
    _
  // Predicated region
  $region6: #{gin_encoder_forward.1} parent=0 // pred_check
    _
  $region7: #{gin_encoder_forward.1} parent=0 // pred_check_branch
    %28 = sbr.rel (0) target = $region9
  $region8: #{gin_encoder_forward.1} parent=0 // pred_region
    _
  $region9: #{gin_encoder_forward.1} parent=0 // pred_fallthru
    _
  // Predicated region
  $region10: #{gin_encoder_forward.1} parent=0 // pred_check
    _
  $region11: #{gin_encoder_forward.1} parent=0 // pred_check_branch
    %30 = sbr.rel (0) target = $region13
  $region12: #{gin_encoder_forward.1} parent=0 // pred_region
    _
  $region13: #{gin_encoder_forward.1} parent=0 // pred_fallthru
    _
  // Predicated region
  $region14: #{gin_encoder_forward.1} parent=0 // pred_check
    _
  $region15: #{gin_encoder_forward.1} parent=0 // pred_check_branch
    %32 = sbr.rel (0) target = $region17
  $region16: #{gin_encoder_forward.1} parent=0 // pred_region
    _
  $region17: #{gin_encoder_forward.1} parent=0 // pred_fallthru
    _
  // Predicated region
  $region18: #{gin_encoder_forward.1} parent=0 // pred_check
    _
  $region19: #{gin_encoder_forward.1} parent=0 // pred_check_branch
    %34 = sbr.rel (0) target = $region21
  $region20: #{gin_encoder_forward.1} parent=0 // pred_region
    _
  $region21: #{gin_encoder_forward.1} parent=0 // pred_fallthru
    _
  // Predicated region
  $region22: #{gin_encoder_forward.1} parent=0 // pred_check
    _
  $region23: #{gin_encoder_forward.1} parent=0 // pred_check_branch
    %36 = sbr.rel (0) target = $region25
  $region24: #{gin_encoder_forward.1} parent=0 // pred_region
    _
  $region25: #{gin_encoder_forward.1} parent=0 // pred_fallthru
    _
  // Predicated region
  $region26: #{gin_encoder_forward.1} parent=0 // pred_check
    _
  $region27: #{gin_encoder_forward.1} parent=0 // pred_check_branch
    %38 = sbr.rel (0) target = $region29
  $region28: #{gin_encoder_forward.1} parent=0 // pred_region
    _
  $region29: #{gin_encoder_forward.1} parent=0 // pred_fallthru
    _
  // Predicated region
  $region30: #{gin_encoder_forward.1} parent=0 // pred_check
    _
  $region31: #{gin_encoder_forward.1} parent=0 // pred_check_branch
    %40 = sbr.rel (0) target = $region33
  $region32: #{gin_encoder_forward.1} parent=0 // pred_region
    _
  $region33: #{gin_encoder_forward.1} parent=0 // pred_fallthru
    _
  // Predicated region
  $region34: #{gin_encoder_forward.1} parent=0 // pred_check
    _
  $region35: #{gin_encoder_forward.1} parent=0 // pred_check_branch
    %42 = sbr.rel (0) target = $region37
  $region36: #{gin_encoder_forward.1} parent=0 // pred_region
    _
  $region37: #{gin_encoder_forward.1} parent=0 // pred_fallthru
    _
  // Predicated region
  $region38: #{gin_encoder_forward.1} parent=0 // pred_check
    _
  $region39: #{gin_encoder_forward.1} parent=0 // pred_check_branch
    %44 = sbr.rel (0) target = $region41
  $region40: #{gin_encoder_forward.1} parent=0 // pred_region
    _
  $region41: #{gin_encoder_forward.1} parent=0 // pred_fallthru
    _
  // Predicated region
  $region42: #{gin_encoder_forward.1} parent=0 // pred_check
    _
  $region43: #{gin_encoder_forward.1} parent=0 // pred_check_branch
    %46 = sbr.rel (0) target = $region45
  $region44: #{gin_encoder_forward.1} parent=0 // pred_region
    _
  $region45: #{gin_encoder_forward.1} parent=0 // pred_fallthru
    _
  // Predicated region
  $region46: #{gin_encoder_forward.1} parent=0 // pred_check
    _
  $region47: #{gin_encoder_forward.1} parent=0 // pred_check_branch
    %48 = sbr.rel (0) target = $region49
  $region48: #{gin_encoder_forward.1} parent=0 // pred_region
    _
  $region49: #{gin_encoder_forward.1} parent=0 // pred_fallthru
    _
  // Predicated region
  $region50: #{gin_encoder_forward.1} parent=0 // pred_check
    _
  $region51: #{gin_encoder_forward.1} parent=0 // pred_check_branch
    %50 = sbr.rel (0) target = $region53
  $region52: #{gin_encoder_forward.1} parent=0 // pred_region
    _
  $region53: #{gin_encoder_forward.1} parent=0 // pred_fallthru
    _
  // Predicated region
  $region54: #{gin_encoder_forward.1} parent=0 // pred_check
    _
  $region55: #{gin_encoder_forward.1} parent=0 // pred_check_branch
    %52 = sbr.rel (0) target = $region57
  $region56: #{gin_encoder_forward.1} parent=0 // pred_region
    _
  $region57: #{gin_encoder_forward.1} parent=0 // pred_fallthru
    _
  // Predicated region
  $region58: #{gin_encoder_forward.1} parent=0 // pred_check
    _
  $region59: #{gin_encoder_forward.1} parent=0 // pred_check_branch
    %54 = sbr.rel (0) target = $region61
  $region60: #{gin_encoder_forward.1} parent=0 // pred_region
    _
  $region61: #{gin_encoder_forward.1} parent=0 // pred_fallthru
    _
  // Predicated region
  $region62: #{gin_encoder_forward.1} parent=0 // pred_check
    _
  $region63: #{gin_encoder_forward.1} parent=0 // pred_check_branch
    %56 = sbr.rel (0) target = $region65
  $region64: #{gin_encoder_forward.1} parent=0 // pred_region
    _
  $region65: #{gin_encoder_forward.1} parent=0 // pred_fallthru
    _
  // Predicated region
  $region66: #{gin_encoder_forward.1} parent=0 // pred_check
    _
  $region67: #{gin_encoder_forward.1} parent=0 // pred_check_branch
    %58 = sbr.rel (0) target = $region69
  $region68: #{gin_encoder_forward.1} parent=0 // pred_region
    _
  $region69: #{gin_encoder_forward.1} parent=0 // pred_fallthru
    _
  // Predicated region
  $region70: #{gin_encoder_forward.1} parent=0 // pred_check
    _
  $region71: #{gin_encoder_forward.1} parent=0 // pred_check_branch
    %60 = sbr.rel (0) target = $region73
  $region72: #{gin_encoder_forward.1} parent=0 // pred_region
    _
  $region73: #{gin_encoder_forward.1} parent=0 // pred_fallthru
    _
  // Predicated region
  $region74: #{gin_encoder_forward.1} parent=0 // pred_check
    _
  $region75: #{gin_encoder_forward.1} parent=0 // pred_check_branch
    %62 = sbr.rel (0) target = $region77
  $region76: #{gin_encoder_forward.1} parent=0 // pred_region
    _
  $region77: #{gin_encoder_forward.1} parent=0 // pred_fallthru
    _
  // Predicated region
  $region78: #{gin_encoder_forward.1} parent=0 // pred_check
    _
  $region79: #{gin_encoder_forward.1} parent=0 // pred_check_branch
    %65 = sbr.rel (0) target = $region81
  $region80: #{gin_encoder_forward.1} parent=0 // pred_region
    // Predicated region
    $region93: #{gin_encoder_forward.1} parent=80 // pred_check
      _
    $region94: #{gin_encoder_forward.1} parent=80 // pred_check_branch
      %81 = sbr.rel (0) target = $region96
    $region95: #{gin_encoder_forward.1} parent=80 // pred_region
      loop: start=0, step=1, limit=1
      $region97: #{gin_encoder_forward.1} parent=95 // loop_pre_header
        _
      $region98: #{gin_encoder_forward.1} parent=95 // loop_header
        %s83 = sphi 0, %s87
        %p84 = scmp.ge.s32.totalorder %s83, 1
        %s88 = sphi %s0, %s0
        %s89 = sphi [#allocation2], [#allocation2]
      $region99: #{gin_encoder_forward.1} parent=95 // loop_header_branch
        %86 = sbr.rel (%p84) target = $region103
      $region100: #{gin_encoder_forward.1} parent=95 // loop_body
        %v90 = vld [vmem:[%s88] sm:$0xff]
        %91 = vst [vmem:[%s89] sm:$0xff] %v90
      $region101: #{gin_encoder_forward.1} parent=95 // loop_footer
        %s87 = sadd.s32 1, %s83
      $region102: #{gin_encoder_forward.1} parent=95 // loop_footer_branch
        %82 = sbr.rel target = $region98
      $region103: #{gin_encoder_forward.1} parent=95 // loop_exit
        _
    $region96: #{gin_encoder_forward.1} parent=80 // pred_fallthru
      _
    // Predicated region
    $region104: #{gin_encoder_forward.1} parent=80 // pred_check
      _
    $region105: #{gin_encoder_forward.1} parent=80 // pred_check_branch
      %93 = sbr.rel target = $region107
    $region106: #{gin_encoder_forward.1} parent=80 // pred_region
      _
    $region107: #{gin_encoder_forward.1} parent=80 // pred_fallthru
      _
  $region81: #{gin_encoder_forward.1} parent=0 // pred_fallthru
    _
  // Predicated region
  $region82: #{gin_encoder_forward.1} parent=0 // pred_check
    _
  $region83: #{gin_encoder_forward.1} parent=0 // pred_check_branch
    %67 = sbr.rel target = $region85
  $region84: #{gin_encoder_forward.1} parent=0 // pred_region
    %s69 = ssub.s32 256, 1
    loop: start=0, step=1, limit=1
    $region86: #{gin_encoder_forward.1} parent=84 // loop_pre_header
      _
    $region87: #{gin_encoder_forward.1} parent=84 // loop_header
      %s71 = sphi 0, %s75
      %p72 = scmp.ge.s32.totalorder %s71, 1
      %s76 = sphi %s0, %s0
      %s77 = sphi [#allocation2], [#allocation2]
    $region88: #{gin_encoder_forward.1} parent=84 // loop_header_branch
      %74 = sbr.rel (%p72) target = $region92
    $region89: #{gin_encoder_forward.1} parent=84 // loop_body
      %v78 = vld [vmem:[%s76] sm:%s69]
      %79 = vst [vmem:[%s77] sm:%s69] %v78
    $region90: #{gin_encoder_forward.1} parent=84 // loop_footer
      %s75 = sadd.s32 1, %s71
    $region91: #{gin_encoder_forward.1} parent=84 // loop_footer_branch
      %70 = sbr.rel target = $region87
    $region92: #{gin_encoder_forward.1} parent=84 // loop_exit
      _
  $region85: #{gin_encoder_forward.1} parent=0 // pred_fallthru
    _
  // Predicated region
  $region108: #{gin_encoder_forward.1} parent=0 // pred_check
    _
  $region109: #{gin_encoder_forward.1} parent=0 // pred_check_branch
    %96 = sbr.rel (0) target = $region111
  $region110: #{gin_encoder_forward.1} parent=0 // pred_region
    %97 = vsyncadd [#allocation3], 128
  $region111: #{gin_encoder_forward.1} parent=0 // pred_fallthru
    _
  %v98 = vld [vmem:[%s1] sm:$0xff]
  %v99 = vld [vmem:[%s1 + $0x8] sm:$0xff]
  %v100 = vpack.c.bf16 %v99, %v98
  %s101 = smul.u32 4, 2
  %s102 = smul.u32 %s101, 1
  %s103 = sshll.u32 %s102, 4
  %104 = dma.done [#allocation3], %s103
  %v105 = vld [vmem:[#allocation2] sm:$0xf]
  %v106 = vld [vmem:[#allocation2 + $0x4] sm:$0xf]
  %v109 = vunpack.c.l.b16 %v105
  %v110 = vunpack.c.l.b16 %v106
  %v111 = vpack.c.b16 %v110, %v109
  %vm112 = vcmask 130048
  %v114 = vsel %vm112, %v111, 0
  %116 = vmatpush.bf16.msra.mxu0 0
  %117 = vmatpush.bf16.msra.mxu0 0
  %118 = vmatpush.bf16.msra.mxu0 0
  %119 = vmatpush.bf16.msra.mxu0 0
  %120 = vmatpush.bf16.msra.mxu0 0
  %121 = vmatpush.bf16.msra.mxu0 0
  %122 = vmatpush.bf16.msra.mxu0 0
  %123 = vmatpush.bf16.msra.mxu0 %v100
  %124 = vmatmul.bf16.gmra.mxu0 %v114
  %v125 = vpop.f32.mrf.mxu0
  %v126 = vadd.f32 %v98, %v125
  %v127 = vpop.f32.mrf.mxu0
  %v128 = vadd.f32 %v99, %v127
  %129 = vdwg.mxu0
  %v130 = vld [vmem:[%s4] sm:$0x1]
  %v132 = vperm.slane %v130, 0
  %v134 = vadd.f32 %v126, %v132
  %v135 = vadd.f32 %v128, %v132
  %v136 = vmax.f32 %v134, 0.0
  %v137 = vmax.f32 %v135, 0.0
  %v138 = vpack.c.bf16 %v137, %v136
  %v139 = vld [vmem:[%s5] sm:$0xf]
  %v140 = vld [vmem:[%s5 + $0x4] sm:$0xf]
  %v141 = vld [vmem:[%s5 + $0x8] sm:$0xf]
  %v142 = vld [vmem:[%s5 + $0xc] sm:$0xf]
  %v143 = vld [vmem:[%s5 + $0x10] sm:$0xf]
  %v144 = vld [vmem:[%s5 + $0x14] sm:$0xf]
  %v145 = vld [vmem:[%s5 + $0x18] sm:$0xf]
  %v146 = vld [vmem:[%s5 + $0x1c] sm:$0xf]
  %v147 = vld [vmem:[%s5 + $0x20] sm:$0xf]
  %v148 = vld [vmem:[%s5 + $0x24] sm:$0xf]
  %v149 = vld [vmem:[%s5 + $0x28] sm:$0xf]
  %v150 = vld [vmem:[%s5 + $0x2c] sm:$0xf]
  %v151 = vld [vmem:[%s5 + $0x30] sm:$0xf]
  %v152 = vld [vmem:[%s5 + $0x34] sm:$0xf]
  %v153 = vld [vmem:[%s5 + $0x38] sm:$0xf]
  %v154 = vld [vmem:[%s5 + $0x3c] sm:$0xf]
  %v171 = vunpack.c.l.b16 %v139
  %v172 = vunpack.c.l.b16 %v140
  %v173 = vunpack.c.l.b16 %v141
  %v174 = vunpack.c.l.b16 %v142
  %v175 = vunpack.c.l.b16 %v143
  %v176 = vunpack.c.l.b16 %v144
  %v177 = vunpack.c.l.b16 %v145
  %v178 = vunpack.c.l.b16 %v146
  %v179 = vunpack.c.l.b16 %v147
  %v180 = vunpack.c.l.b16 %v148
  %v181 = vunpack.c.l.b16 %v149
  %v182 = vunpack.c.l.b16 %v150
  %v183 = vunpack.c.l.b16 %v151
  %v184 = vunpack.c.l.b16 %v152
  %v185 = vunpack.c.l.b16 %v153
  %v186 = vunpack.c.l.b16 %v154
  %v187 = vpack.c.b16 %v172, %v171
  %v188 = vpack.c.b16 %v174, %v173
  %v189 = vpack.c.b16 %v176, %v175
  %v190 = vpack.c.b16 %v178, %v177
  %v191 = vpack.c.b16 %v180, %v179
  %v192 = vpack.c.b16 %v182, %v181
  %v193 = vpack.c.b16 %v184, %v183
  %v194 = vpack.c.b16 %v186, %v185
  %203 = vmatpush.bf16.msra.mxu0 %v194
  %204 = vmatpush.bf16.msra.mxu0 %v193
  %205 = vmatpush.bf16.msra.mxu0 %v192
  %206 = vmatpush.bf16.msra.mxu0 %v191
  %207 = vmatpush.bf16.msra.mxu0 %v190
  %208 = vmatpush.bf16.msra.mxu0 %v189
  %209 = vmatpush.bf16.msra.mxu0 %v188
  %210 = vmatpush.bf16.msra.mxu0 %v187
  %211 = vmatmul.bf16.gmra.mxu0 %v138
  %v212 = vpop.f32.mrf.mxu0
  %v213 = vadd.f32 0.0, %v212
  %v214 = vpop.f32.mrf.mxu0
  %v215 = vadd.f32 0.0, %v214
  %216 = vdwg.mxu0
  %v217 = vadd.f32 %v213, %v215
  %v218 = vrot.slane %v217, 4
  %v219 = vadd.f32 %v217, %v218
  %v220 = vrot.slane %v219, 2
  %v221 = vadd.f32 %v219, %v220
  %v222 = vrot.slane %v221, 1
  %v223 = vadd.f32 %v221, %v222
  %v224 = vrcp.pop 16.0
  %v225 = vmul.f32 16.0, %v224
  %v226 = vsub.f32 1.0, %v225
  %v227 = vmul.f32 %v224, %v226
  %v228 = vadd.f32 %v224, %v227
  %vm229 = vweird.f32 %v224
  %v230 = vsel %vm229, %v224, %v228
  %v231 = vmul.f32 %v223, %v230
  %v232 = vmul.f32 %v213, %v213
  %v233 = vmul.f32 %v215, %v215
  %v234 = vadd.f32 %v232, %v233
  %v235 = vrot.slane %v234, 4
  %v236 = vadd.f32 %v234, %v235
  %v237 = vrot.slane %v236, 2
  %v238 = vadd.f32 %v236, %v237
  %v239 = vrot.slane %v238, 1
  %v240 = vadd.f32 %v238, %v239
  %v241 = vmul.f32 %v240, %v230
  %v242 = vmul.f32 %v231, %v231
  %v243 = vsub.f32 %v241, %v242
  %v244 = vmax.f32 %v243, 0.0
  %v245 = vsub.f32 %v213, %v231
  %v246 = vsub.f32 %v215, %v231
  %v247 = vadd.f32 %v244, 1e-05
  %v248 = vrsqrt.pop %v247
  %v249 = vmul.f32 %v248, %v247
  %v250 = vmul.f32 %v249, %v248
  %v251 = vmul.f32 0.5, %v250
  %v252 = vsub.f32 1.5, %v251
  %v253 = vmul.f32 %v248, %v252
  %vm254 = vweird.f32 %v247
  %vm255 = vweird.f32 %v248
  %vm256 = vmor %vm254, %vm255
  %v257 = vsel %vm256, %v248, %v253
  %v258 = vmul.f32 %v245, %v257
  %v259 = vmul.f32 %v246, %v257
  %v260 = vld [vmem:[%s6] sm:$0x1]
  %v262 = vperm.slane %v260, 0
  %v264 = vmul.f32 %v258, %v262
  %v265 = vmul.f32 %v259, %v262
  %v266 = vld [vmem:[%s7] sm:$0x1]
  %v268 = vperm.slane %v266, 0
  %v270 = vadd.f32 %v264, %v268
  %v271 = vadd.f32 %v265, %v268
  %v272 = vmax.f32 %v270, 0.0
  %v273 = vmax.f32 %v271, 0.0
  %v274 = vpack.c.bf16 %v273, %v272
  %v275 = vld [vmem:[%s8] sm:$0xf]
  %v276 = vld [vmem:[%s8 + $0x4] sm:$0xf]
  %v277 = vld [vmem:[%s8 + $0x8] sm:$0xf]
  %v278 = vld [vmem:[%s8 + $0xc] sm:$0xf]
  %v279 = vld [vmem:[%s8 + $0x10] sm:$0xf]
  %v280 = vld [vmem:[%s8 + $0x14] sm:$0xf]
  %v281 = vld [vmem:[%s8 + $0x18] sm:$0xf]
  %v282 = vld [vmem:[%s8 + $0x1c] sm:$0xf]
  %v283 = vld [vmem:[%s8 + $0x20] sm:$0xf]
  %v284 = vld [vmem:[%s8 + $0x24] sm:$0xf]
  %v285 = vld [vmem:[%s8 + $0x28] sm:$0xf]
  %v286 = vld [vmem:[%s8 + $0x2c] sm:$0xf]
  %v287 = vld [vmem:[%s8 + $0x30] sm:$0xf]
  %v288 = vld [vmem:[%s8 + $0x34] sm:$0xf]
  %v289 = vld [vmem:[%s8 + $0x38] sm:$0xf]
  %v290 = vld [vmem:[%s8 + $0x3c] sm:$0xf]
  %v307 = vunpack.c.l.b16 %v275
  %v308 = vunpack.c.l.b16 %v276
  %v309 = vunpack.c.l.b16 %v277
  %v310 = vunpack.c.l.b16 %v278
  %v311 = vunpack.c.l.b16 %v279
  %v312 = vunpack.c.l.b16 %v280
  %v313 = vunpack.c.l.b16 %v281
  %v314 = vunpack.c.l.b16 %v282
  %v315 = vunpack.c.l.b16 %v283
  %v316 = vunpack.c.l.b16 %v284
  %v317 = vunpack.c.l.b16 %v285
  %v318 = vunpack.c.l.b16 %v286
  %v319 = vunpack.c.l.b16 %v287
  %v320 = vunpack.c.l.b16 %v288
  %v321 = vunpack.c.l.b16 %v289
  %v322 = vunpack.c.l.b16 %v290
  %v323 = vpack.c.b16 %v308, %v307
  %v324 = vpack.c.b16 %v310, %v309
  %v325 = vpack.c.b16 %v312, %v311
  %v326 = vpack.c.b16 %v314, %v313
  %v327 = vpack.c.b16 %v316, %v315
  %v328 = vpack.c.b16 %v318, %v317
  %v329 = vpack.c.b16 %v320, %v319
  %v330 = vpack.c.b16 %v322, %v321
  %339 = vmatpush.bf16.msra.mxu0 %v330
  %340 = vmatpush.bf16.msra.mxu0 %v329
  %341 = vmatpush.bf16.msra.mxu0 %v328
  %342 = vmatpush.bf16.msra.mxu0 %v327
  %343 = vmatpush.bf16.msra.mxu0 %v326
  %344 = vmatpush.bf16.msra.mxu0 %v325
  %345 = vmatpush.bf16.msra.mxu0 %v324
  %346 = vmatpush.bf16.msra.mxu0 %v323
  %347 = vmatmul.bf16.gmra.mxu0 %v274
  %v348 = vpop.f32.mrf.mxu0
  %v349 = vadd.f32 0.0, %v348
  %v350 = vpop.f32.mrf.mxu0
  %v351 = vadd.f32 0.0, %v350
  %352 = vdwg.mxu0
  %v353 = vpack.c.bf16 %v351, %v349
  %354 = vmatpush.bf16.msra.mxu0 0
  %355 = vmatpush.bf16.msra.mxu0 0
  %356 = vmatpush.bf16.msra.mxu0 0
  %357 = vmatpush.bf16.msra.mxu0 0
  %358 = vmatpush.bf16.msra.mxu0 0
  %359 = vmatpush.bf16.msra.mxu0 0
  %360 = vmatpush.bf16.msra.mxu0 0
  %361 = vmatpush.bf16.msra.mxu0 %v353
  %362 = vmatmul.bf16.gmra.mxu0 %v114
  %v363 = vpop.f32.mrf.mxu0
  %v364 = vadd.f32 %v349, %v363
  %v365 = vpop.f32.mrf.mxu0
  %v366 = vadd.f32 %v351, %v365
  %367 = vdwg.mxu0
  %v368 = vld [vmem:[%s9] sm:$0x1]
  %v370 = vperm.slane %v368, 0
  %v372 = vadd.f32 %v364, %v370
  %v373 = vadd.f32 %v366, %v370
  %v374 = vmax.f32 %v372, 0.0
  %v375 = vmax.f32 %v373, 0.0
  %v376 = vpack.c.bf16 %v375, %v374
  %v377 = vld [vmem:[%s10] sm:$0xf]
  %v378 = vld [vmem:[%s10 + $0x4] sm:$0xf]
  %v379 = vld [vmem:[%s10 + $0x8] sm:$0xf]
  %v380 = vld [vmem:[%s10 + $0xc] sm:$0xf]
  %v381 = vld [vmem:[%s10 + $0x10] sm:$0xf]
  %v382 = vld [vmem:[%s10 + $0x14] sm:$0xf]
  %v383 = vld [vmem:[%s10 + $0x18] sm:$0xf]
  %v384 = vld [vmem:[%s10 + $0x1c] sm:$0xf]
  %v385 = vld [vmem:[%s10 + $0x20] sm:$0xf]
  %v386 = vld [vmem:[%s10 + $0x24] sm:$0xf]
  %v387 = vld [vmem:[%s10 + $0x28] sm:$0xf]
  %v388 = vld [vmem:[%s10 + $0x2c] sm:$0xf]
  %v389 = vld [vmem:[%s10 + $0x30] sm:$0xf]
  %v390 = vld [vmem:[%s10 + $0x34] sm:$0xf]
  %v391 = vld [vmem:[%s10 + $0x38] sm:$0xf]
  %v392 = vld [vmem:[%s10 + $0x3c] sm:$0xf]
  %v409 = vunpack.c.l.b16 %v377
  %v410 = vunpack.c.l.b16 %v378
  %v411 = vunpack.c.l.b16 %v379
  %v412 = vunpack.c.l.b16 %v380
  %v413 = vunpack.c.l.b16 %v381
  %v414 = vunpack.c.l.b16 %v382
  %v415 = vunpack.c.l.b16 %v383
  %v416 = vunpack.c.l.b16 %v384
  %v417 = vunpack.c.l.b16 %v385
  %v418 = vunpack.c.l.b16 %v386
  %v419 = vunpack.c.l.b16 %v387
  %v420 = vunpack.c.l.b16 %v388
  %v421 = vunpack.c.l.b16 %v389
  %v422 = vunpack.c.l.b16 %v390
  %v423 = vunpack.c.l.b16 %v391
  %v424 = vunpack.c.l.b16 %v392
  %v425 = vpack.c.b16 %v410, %v409
  %v426 = vpack.c.b16 %v412, %v411
  %v427 = vpack.c.b16 %v414, %v413
  %v428 = vpack.c.b16 %v416, %v415
  %v429 = vpack.c.b16 %v418, %v417
  %v430 = vpack.c.b16 %v420, %v419
  %v431 = vpack.c.b16 %v422, %v421
  %v432 = vpack.c.b16 %v424, %v423
  %441 = vmatpush.bf16.msra.mxu0 %v432
  %442 = vmatpush.bf16.msra.mxu0 %v431
  %443 = vmatpush.bf16.msra.mxu0 %v430
  %444 = vmatpush.bf16.msra.mxu0 %v429
  %445 = vmatpush.bf16.msra.mxu0 %v428
  %446 = vmatpush.bf16.msra.mxu0 %v427
  %447 = vmatpush.bf16.msra.mxu0 %v426
  %448 = vmatpush.bf16.msra.mxu0 %v425
  %449 = vmatmul.bf16.gmra.mxu0 %v376
  %v450 = vpop.f32.mrf.mxu0
  %v451 = vadd.f32 0.0, %v450
  %v452 = vpop.f32.mrf.mxu0
  %v453 = vadd.f32 0.0, %v452
  %454 = vdwg.mxu0
  %v455 = vadd.f32 %v451, %v453
  %v456 = vrot.slane %v455, 4
  %v457 = vadd.f32 %v455, %v456
  %v458 = vrot.slane %v457, 2
  %v459 = vadd.f32 %v457, %v458
  %v460 = vrot.slane %v459, 1
  %v461 = vadd.f32 %v459, %v460
  %v462 = vmul.f32 %v461, %v230
  %v463 = vmul.f32 %v451, %v451
  %v464 = vmul.f32 %v453, %v453
  %v465 = vadd.f32 %v463, %v464
  %v466 = vrot.slane %v465, 4
  %v467 = vadd.f32 %v465, %v466
  %v468 = vrot.slane %v467, 2
  %v469 = vadd.f32 %v467, %v468
  %v470 = vrot.slane %v469, 1
  %v471 = vadd.f32 %v469, %v470
  %v472 = vmul.f32 %v471, %v230
  %v473 = vmul.f32 %v462, %v462
  %v474 = vsub.f32 %v472, %v473
  %v475 = vmax.f32 %v474, 0.0
  %v476 = vsub.f32 %v451, %v462
  %v477 = vsub.f32 %v453, %v462
  %v478 = vadd.f32 %v475, 1e-05
  %v479 = vrsqrt.pop %v478
  %v480 = vmul.f32 %v479, %v478
  %v481 = vmul.f32 %v480, %v479
  %v482 = vmul.f32 0.5, %v481
  %v483 = vsub.f32 1.5, %v482
  %v484 = vmul.f32 %v479, %v483
  %vm485 = vweird.f32 %v478
  %vm486 = vweird.f32 %v479
  %vm487 = vmor %vm485, %vm486
  %v488 = vsel %vm487, %v479, %v484
  %v489 = vmul.f32 %v476, %v488
  %v490 = vmul.f32 %v477, %v488
  %v491 = vld [vmem:[%s11] sm:$0x1]
  %v493 = vperm.slane %v491, 0
  %v495 = vmul.f32 %v489, %v493
  %v496 = vmul.f32 %v490, %v493
  %v497 = vld [vmem:[%s12] sm:$0x1]
  %v499 = vperm.slane %v497, 0
  %v501 = vadd.f32 %v495, %v499
  %v502 = vadd.f32 %v496, %v499
  %v503 = vmax.f32 %v501, 0.0
  %v504 = vmax.f32 %v502, 0.0
  %v505 = vpack.c.bf16 %v504, %v503
  %v506 = vld [vmem:[%s13] sm:$0xf]
  %v507 = vld [vmem:[%s13 + $0x4] sm:$0xf]
  %v508 = vld [vmem:[%s13 + $0x8] sm:$0xf]
  %v509 = vld [vmem:[%s13 + $0xc] sm:$0xf]
  %v510 = vld [vmem:[%s13 + $0x10] sm:$0xf]
  %v511 = vld [vmem:[%s13 + $0x14] sm:$0xf]
  %v512 = vld [vmem:[%s13 + $0x18] sm:$0xf]
  %v513 = vld [vmem:[%s13 + $0x1c] sm:$0xf]
  %v514 = vld [vmem:[%s13 + $0x20] sm:$0xf]
  %v515 = vld [vmem:[%s13 + $0x24] sm:$0xf]
  %v516 = vld [vmem:[%s13 + $0x28] sm:$0xf]
  %v517 = vld [vmem:[%s13 + $0x2c] sm:$0xf]
  %v518 = vld [vmem:[%s13 + $0x30] sm:$0xf]
  %v519 = vld [vmem:[%s13 + $0x34] sm:$0xf]
  %v520 = vld [vmem:[%s13 + $0x38] sm:$0xf]
  %v521 = vld [vmem:[%s13 + $0x3c] sm:$0xf]
  %v538 = vunpack.c.l.b16 %v506
  %v539 = vunpack.c.l.b16 %v507
  %v540 = vunpack.c.l.b16 %v508
  %v541 = vunpack.c.l.b16 %v509
  %v542 = vunpack.c.l.b16 %v510
  %v543 = vunpack.c.l.b16 %v511
  %v544 = vunpack.c.l.b16 %v512
  %v545 = vunpack.c.l.b16 %v513
  %v546 = vunpack.c.l.b16 %v514
  %v547 = vunpack.c.l.b16 %v515
  %v548 = vunpack.c.l.b16 %v516
  %v549 = vunpack.c.l.b16 %v517
  %v550 = vunpack.c.l.b16 %v518
  %v551 = vunpack.c.l.b16 %v519
  %v552 = vunpack.c.l.b16 %v520
  %v553 = vunpack.c.l.b16 %v521
  %v554 = vpack.c.b16 %v539, %v538
  %v555 = vpack.c.b16 %v541, %v540
  %v556 = vpack.c.b16 %v543, %v542
  %v557 = vpack.c.b16 %v545, %v544
  %v558 = vpack.c.b16 %v547, %v546
  %v559 = vpack.c.b16 %v549, %v548
  %v560 = vpack.c.b16 %v551, %v550
  %v561 = vpack.c.b16 %v553, %v552
  %570 = vmatpush.bf16.msra.mxu0 %v561
  %571 = vmatpush.bf16.msra.mxu0 %v560
  %572 = vmatpush.bf16.msra.mxu0 %v559
  %573 = vmatpush.bf16.msra.mxu0 %v558
  %574 = vmatpush.bf16.msra.mxu0 %v557
  %575 = vmatpush.bf16.msra.mxu0 %v556
  %576 = vmatpush.bf16.msra.mxu0 %v555
  %577 = vmatpush.bf16.msra.mxu0 %v554
  %578 = vmatmul.bf16.gmra.mxu0 %v505
  %v579 = vpop.f32.mrf.mxu0
  %v580 = vadd.f32 0.0, %v579
  %v581 = vpop.f32.mrf.mxu0
  %v582 = vadd.f32 0.0, %v581
  %583 = vdwg.mxu0
  %v584 = vpack.c.bf16 %v582, %v580
  %585 = vmatpush.bf16.msra.mxu0 0
  %586 = vmatpush.bf16.msra.mxu0 0
  %587 = vmatpush.bf16.msra.mxu0 0
  %588 = vmatpush.bf16.msra.mxu0 0
  %589 = vmatpush.bf16.msra.mxu0 0
  %590 = vmatpush.bf16.msra.mxu0 0
  %591 = vmatpush.bf16.msra.mxu0 0
  %592 = vmatpush.bf16.msra.mxu0 %v584
  %593 = vmatmul.bf16.gmra.mxu0 %v114
  %v594 = vpop.f32.mrf.mxu0
  %v595 = vadd.f32 %v580, %v594
  %v596 = vpop.f32.mrf.mxu0
  %v597 = vadd.f32 %v582, %v596
  %598 = vdwg.mxu0
  %v599 = vld [vmem:[%s14] sm:$0x1]
  %v601 = vperm.slane %v599, 0
  %v603 = vadd.f32 %v595, %v601
  %v604 = vadd.f32 %v597, %v601
  %v605 = vmax.f32 %v603, 0.0
  %v606 = vmax.f32 %v604, 0.0
  %v607 = vpack.c.bf16 %v606, %v605
  %v608 = vld [vmem:[%s15] sm:$0xf]
  %v609 = vld [vmem:[%s15 + $0x4] sm:$0xf]
  %v610 = vld [vmem:[%s15 + $0x8] sm:$0xf]
  %v611 = vld [vmem:[%s15 + $0xc] sm:$0xf]
  %v612 = vld [vmem:[%s15 + $0x10] sm:$0xf]
  %v613 = vld [vmem:[%s15 + $0x14] sm:$0xf]
  %v614 = vld [vmem:[%s15 + $0x18] sm:$0xf]
  %v615 = vld [vmem:[%s15 + $0x1c] sm:$0xf]
  %v616 = vld [vmem:[%s15 + $0x20] sm:$0xf]
  %v617 = vld [vmem:[%s15 + $0x24] sm:$0xf]
  %v618 = vld [vmem:[%s15 + $0x28] sm:$0xf]
  %v619 = vld [vmem:[%s15 + $0x2c] sm:$0xf]
  %v620 = vld [vmem:[%s15 + $0x30] sm:$0xf]
  %v621 = vld [vmem:[%s15 + $0x34] sm:$0xf]
  %v622 = vld [vmem:[%s15 + $0x38] sm:$0xf]
  %v623 = vld [vmem:[%s15 + $0x3c] sm:$0xf]
  %v640 = vunpack.c.l.b16 %v608
  %v641 = vunpack.c.l.b16 %v609
  %v642 = vunpack.c.l.b16 %v610
  %v643 = vunpack.c.l.b16 %v611
  %v644 = vunpack.c.l.b16 %v612
  %v645 = vunpack.c.l.b16 %v613
  %v646 = vunpack.c.l.b16 %v614
  %v647 = vunpack.c.l.b16 %v615
  %v648 = vunpack.c.l.b16 %v616
  %v649 = vunpack.c.l.b16 %v617
  %v650 = vunpack.c.l.b16 %v618
  %v651 = vunpack.c.l.b16 %v619
  %v652 = vunpack.c.l.b16 %v620
  %v653 = vunpack.c.l.b16 %v621
  %v654 = vunpack.c.l.b16 %v622
  %v655 = vunpack.c.l.b16 %v623
  %v656 = vpack.c.b16 %v641, %v640
  %v657 = vpack.c.b16 %v643, %v642
  %v658 = vpack.c.b16 %v645, %v644
  %v659 = vpack.c.b16 %v647, %v646
  %v660 = vpack.c.b16 %v649, %v648
  %v661 = vpack.c.b16 %v651, %v650
  %v662 = vpack.c.b16 %v653, %v652
  %v663 = vpack.c.b16 %v655, %v654
  %672 = vmatpush.bf16.msra.mxu0 %v663
  %673 = vmatpush.bf16.msra.mxu0 %v662
  %674 = vmatpush.bf16.msra.mxu0 %v661
  %675 = vmatpush.bf16.msra.mxu0 %v660
  %676 = vmatpush.bf16.msra.mxu0 %v659
  %677 = vmatpush.bf16.msra.mxu0 %v658
  %678 = vmatpush.bf16.msra.mxu0 %v657
  %679 = vmatpush.bf16.msra.mxu0 %v656
  %680 = vmatmul.bf16.gmra.mxu0 %v607
  %v681 = vpop.f32.mrf.mxu0
  %v682 = vadd.f32 0.0, %v681
  %v683 = vpop.f32.mrf.mxu0
  %v684 = vadd.f32 0.0, %v683
  %685 = vdwg.mxu0
  %v686 = vadd.f32 %v682, %v684
  %v687 = vrot.slane %v686, 4
  %v688 = vadd.f32 %v686, %v687
  %v689 = vrot.slane %v688, 2
  %v690 = vadd.f32 %v688, %v689
  %v691 = vrot.slane %v690, 1
  %v692 = vadd.f32 %v690, %v691
  %v693 = vmul.f32 %v692, %v230
  %v694 = vmul.f32 %v682, %v682
  %v695 = vmul.f32 %v684, %v684
  %v696 = vadd.f32 %v694, %v695
  %v697 = vrot.slane %v696, 4
  %v698 = vadd.f32 %v696, %v697
  %v699 = vrot.slane %v698, 2
  %v700 = vadd.f32 %v698, %v699
  %v701 = vrot.slane %v700, 1
  %v702 = vadd.f32 %v700, %v701
  %v703 = vmul.f32 %v702, %v230
  %v704 = vmul.f32 %v693, %v693
  %v705 = vsub.f32 %v703, %v704
  %v706 = vmax.f32 %v705, 0.0
  %v707 = vsub.f32 %v682, %v693
  %v708 = vsub.f32 %v684, %v693
  %v709 = vadd.f32 %v706, 1e-05
  %v710 = vrsqrt.pop %v709
  %v711 = vmul.f32 %v710, %v709
  %v712 = vmul.f32 %v711, %v710
  %v713 = vmul.f32 0.5, %v712
  %v714 = vsub.f32 1.5, %v713
  %v715 = vmul.f32 %v710, %v714
  %vm716 = vweird.f32 %v709
  %vm717 = vweird.f32 %v710
  %vm718 = vmor %vm716, %vm717
  %v719 = vsel %vm718, %v710, %v715
  %v720 = vmul.f32 %v707, %v719
  %v721 = vmul.f32 %v708, %v719
  %v722 = vld [vmem:[%s16] sm:$0x1]
  %v724 = vperm.slane %v722, 0
  %v726 = vmul.f32 %v720, %v724
  %v727 = vmul.f32 %v721, %v724
  %v728 = vld [vmem:[%s17] sm:$0x1]
  %v730 = vperm.slane %v728, 0
  %v732 = vadd.f32 %v726, %v730
  %v733 = vadd.f32 %v727, %v730
  %v734 = vmax.f32 %v732, 0.0
  %v735 = vmax.f32 %v733, 0.0
  %v736 = vpack.c.bf16 %v735, %v734
  %v737 = vld [vmem:[%s2] sm:$0xf]
  %v739 = vsel %vm112, %v737, 0
  %741 = vmatpush.bf16.msra.mxu0 0
  %742 = vmatpush.bf16.msra.mxu0 0
  %743 = vmatpush.bf16.msra.mxu0 0
  %744 = vmatpush.bf16.msra.mxu0 0
  %745 = vmatpush.bf16.msra.mxu0 0
  %746 = vmatpush.bf16.msra.mxu0 0
  %747 = vmatpush.bf16.msra.mxu0 0
  %748 = vmatpush.bf16.msra.mxu0 %v736
  %749 = vmatmul.bf16.gmra.mxu0 %v739
  %v750 = vpop.f32.mrf.mxu0
  %v751 = vadd.f32 0.0, %v750
  %v752 = vpop.f32.mrf.mxu0
  %753 = vdwg.mxu0
  %v754 = vld [vmem:[%s3] sm:$0xff]
  %756 = vset.pattern.permute.xlu0 0
  %757 = vperm.xlu0 %756, %v754
  %v758 = vpop.permute.xlu0 %757
  %v760 = vmul.f32 %v751, %v758
  %v761 = vpack.c.bf16 %v760, %v760
  %v762 = vld [vmem:[%s18] sm:$0xf]
  %v763 = vld [vmem:[%s18 + $0x4] sm:$0xf]
  %v764 = vld [vmem:[%s18 + $0x8] sm:$0xf]
  %v765 = vld [vmem:[%s18 + $0xc] sm:$0xf]
  %v766 = vld [vmem:[%s18 + $0x10] sm:$0xf]
  %v767 = vld [vmem:[%s18 + $0x14] sm:$0xf]
  %v768 = vld [vmem:[%s18 + $0x18] sm:$0xf]
  %v769 = vld [vmem:[%s18 + $0x1c] sm:$0xf]
  %v770 = vld [vmem:[%s18 + $0x20] sm:$0xf]
  %v771 = vld [vmem:[%s18 + $0x24] sm:$0xf]
  %v772 = vld [vmem:[%s18 + $0x28] sm:$0xf]
  %v773 = vld [vmem:[%s18 + $0x2c] sm:$0xf]
  %v774 = vld [vmem:[%s18 + $0x30] sm:$0xf]
  %v775 = vld [vmem:[%s18 + $0x34] sm:$0xf]
  %v776 = vld [vmem:[%s18 + $0x38] sm:$0xf]
  %v777 = vld [vmem:[%s18 + $0x3c] sm:$0xf]
  %v778 = vld [vmem:[%s19] sm:$0x1]
  %v780 = vperm.slane %v778, 0
  %v798 = vunpack.c.l.b16 %v762
  %v799 = vunpack.c.l.b16 %v763
  %v800 = vunpack.c.l.b16 %v764
  %v801 = vunpack.c.l.b16 %v765
  %v802 = vunpack.c.l.b16 %v766
  %v803 = vunpack.c.l.b16 %v767
  %v804 = vunpack.c.l.b16 %v768
  %v805 = vunpack.c.l.b16 %v769
  %v806 = vunpack.c.l.b16 %v770
  %v807 = vunpack.c.l.b16 %v771
  %v808 = vunpack.c.l.b16 %v772
  %v809 = vunpack.c.l.b16 %v773
  %v810 = vunpack.c.l.b16 %v774
  %v811 = vunpack.c.l.b16 %v775
  %v812 = vunpack.c.l.b16 %v776
  %v813 = vunpack.c.l.b16 %v777
  %v814 = vpack.c.b16 %v799, %v798
  %v815 = vpack.c.b16 %v801, %v800
  %v816 = vpack.c.b16 %v803, %v802
  %v817 = vpack.c.b16 %v805, %v804
  %v818 = vpack.c.b16 %v807, %v806
  %v819 = vpack.c.b16 %v809, %v808
  %v820 = vpack.c.b16 %v811, %v810
  %v821 = vpack.c.b16 %v813, %v812
  %830 = vmatpush.bf16.msra.mxu0 %v821
  %831 = vmatpush.bf16.msra.mxu0 %v820
  %832 = vmatpush.bf16.msra.mxu0 %v819
  %833 = vmatpush.bf16.msra.mxu0 %v818
  %834 = vmatpush.bf16.msra.mxu0 %v817
  %835 = vmatpush.bf16.msra.mxu0 %v816
  %836 = vmatpush.bf16.msra.mxu0 %v815
  %837 = vmatpush.bf16.msra.mxu0 %v814
  %838 = vmatmul.bf16.gmra.mxu0 %v761
  %v839 = vpop.f32.mrf.mxu0
  %v840 = vadd.f32 %v780, %v839
  %v841 = vpop.f32.mrf.mxu0
  %842 = vdwg.mxu0
  %843 = vst [vmem:[%s20] sm:$0xff] %v840
  // Predicated region
  $region112: #{gin_encoder_forward.1} parent=0 // pred_check
    _
  $region113: #{gin_encoder_forward.1} parent=0 // pred_check_branch
    %845 = sbr.rel (0) target = $region115
  $region114: #{gin_encoder_forward.1} parent=0 // pred_region
    _
  $region115: #{gin_encoder_forward.1} parent=0 // pred_fallthru
    _
  // Predicated region
  $region116: #{gin_encoder_forward.1} parent=0 // pred_check
    _
  $region117: #{gin_encoder_forward.1} parent=0 // pred_check_branch
    %847 = sbr.rel (0) target = $region119
  $region118: #{gin_encoder_forward.1} parent=0 // pred_region
    _
  $region119: #{gin_encoder_forward.1} parent=0 // pred_fallthru
    _
  %848 = vsyncmov [#allocation3]
  %s849 = vpop.sfrf %848
  %p850 = scmp.eq.s32.totalorder %s849, 0
  %p851 = pneg %p850
  %853 = shalt.err (%p851)

</llo_original>
